<compile_context>
chip_gen: v7x
topology: tpu7x:2x2x1
jax: 0.10.0
libtpu: 0.0.40
codegen_flags: <defaults>
</compile_context>

<pallas_src>
import functools

import jax
import jax.numpy as jnp
from jax.experimental import pallas as pl
from jax.experimental.pallas import tpu as pltpu


def _round_up(v, m):
    return (v + m - 1) // m * m


def _sublane_granularity(dtype):
    # Native sublane tile: (8,128) f32, (16,128) bf16, (32,128) 8-bit.
    return {4: 8, 2: 16, 1: 32}.get(jnp.dtype(dtype).itemsize, 8)


def _largest_divisor_tile(dim_pad, cap):
    """Largest multiple-of-128 divisor of dim_pad that is <= cap."""
    q = dim_pad // 128
    best = 128
    for d in range(1, q + 1):
        if q % d == 0 and d * 128 <= cap:
            best = d * 128
    return best


# --------------------------------------------------------------------------
# Kernels
# --------------------------------------------------------------------------
def _lora_down_kernel(x_ref, at_ref, z_ref):
    """z[i] = sum_k x[i, k] @ A^T[k]  (f32 output, resident across the k axis)."""
    @pl.when(pl.program_id(1) == 0)
    def _init():
        z_ref[...] = jnp.zeros_like(z_ref)

    z_ref[...] += jnp.dot(x_ref[...], at_ref[...],
                          preferred_element_type=jnp.float32)


def _linear_bias_kernel(x_ref, wt_ref, b_ref, o_ref, acc_ref):
    """o[i, j] = sum_k x[i, k] @ W^T[k, j] + b[j]  (merged-LoRA fast path)."""
    k = pl.program_id(2)

    @pl.when(k == 0)
    def _init():
        acc_ref[...] = jnp.broadcast_to(
            b_ref[...].astype(jnp.float32), acc_ref.shape)

    acc_ref[...] += jnp.dot(x_ref[...], wt_ref[...],
                            preferred_element_type=jnp.float32)

    @pl.when(k == pl.num_programs(2) - 1)
    def _finalize():
        o_ref[...] = acc_ref[...].astype(o_ref.dtype)


def _lora_linear_kernel(x_ref, wt_ref, b_ref, z_ref, bt_ref, o_ref, acc_ref):
    """o[i, j] = sum_k x[i, k] @ W^T[k, j] + b[j] + z[i] @ B^T[:, j].

    z (precomputed LoRA down-projection) has a block index depending only on i,
    so Pallas only re-DMAs it when i changes; the up-projection is applied once
    on the last K step, entirely in f32.
    """
    k = pl.program_id(2)

    @pl.when(k == 0)
    def _init():
        acc_ref[...] = jnp.broadcast_to(
            b_ref[...].astype(jnp.float32), acc_ref.shape)

    acc_ref[...] += jnp.dot(x_ref[...], wt_ref[...],
                            preferred_element_type=jnp.float32)

    @pl.when(k == pl.num_programs(2) - 1)
    def _finalize():
        lora = jnp.dot(z_ref[...], bt_ref[...],
                       preferred_element_type=jnp.float32)
        o_ref[...] = (acc_ref[...] + lora).astype(o_ref.dtype)


# --------------------------------------------------------------------------
# One-time weight preparation (outside the per-token jitted path)
# --------------------------------------------------------------------------
def prepare_lora_linear_params(w_fc, b_fc, w_a, w_b,
                               compute_dtype=jnp.bfloat16,
                               merge_lora=False):
    """Transpose to lane-dense layout, zero-pad K/N/rank to multiples of 128,
    cast the streamed weights to compute_dtype (bf16 by default).

    merge_lora=True folds dW = B @ A into W for frozen-adapter serving
    (returns at = bt = None; the wrapper dispatches a plain matmul kernel).

    w_fc: (out, in) nn.Linear layout; b_fc: (out,); w_a: (rank, in); w_b: (out, rank).
    """
    out_features, in_features = w_fc.shape
    rank = w_a.shape[0]
    k_pad = _round_up(in_features, 128)
    n_pad = _round_up(out_features, 128)
    r_pad = _round_up(rank, 128)

    # Bias stays f32: folded into the f32 accumulator init.
    b2 = jnp.zeros((1, n_pad), jnp.float32).at[0, :out_features].set(
        b_fc.astype(jnp.float32))

    # TODO(synk): fp8 W^T path with per-channel scales for v7x serving.
    if merge_lora:
        w_eff = (w_fc.astype(jnp.float32)
                 + w_b.astype(jnp.float32) @ w_a.astype(jnp.float32))
        wt = jnp.zeros((k_pad, n_pad), compute_dtype).at[
            :in_features, :out_features].set(w_eff.T.astype(compute_dtype))
        return wt, b2, None, None

    wt = jnp.zeros((k_pad, n_pad), compute_dtype).at[
        :in_features, :out_features].set(w_fc.T.astype(compute_dtype))
    at = jnp.zeros((k_pad, r_pad), compute_dtype).at[
        :in_features, :rank].set(w_a.T.astype(compute_dtype))
    # B^T kept f32 so the (tiny) up-projection is full precision.
    bt = jnp.zeros((r_pad, n_pad), jnp.float32).at[
        :rank, :out_features].set(w_b.T.astype(jnp.float32))
    return wt, b2, at, bt


# --------------------------------------------------------------------------
# Forward wrapper
# --------------------------------------------------------------------------
def to_qkv_wrapped_with_lora(x, wt, b2, at, bt, *, out_features, out_dtype=None):
    """y = x @ W^T + b + (x @ A^T) @ B^T   (ToQKV_WrappedWithLoRA.forward)."""
    in_features = x.shape[-1]
    k_pad, n_pad = wt.shape
    compute_dtype = wt.dtype
    if out_dtype is None:
        out_dtype = x.dtype

    lead = x.shape[:-1]
    x2d = x.reshape(-1, in_features).astype(compute_dtype)
    m = x2d.shape[0]

    # ---- tile selection ----------------------------------------------------
    m_gran = max(_sublane_granularity(compute_dtype),
                 _sublane_granularity(out_dtype), 8)
    if m >= 512:
        tm = 512
    elif m >= 256:
        tm = 256
    elif m >= 128:
        tm = 128
    else:
        tm = _round_up(m, m_gran)
    m_pad = _round_up(m, tm)

    tn = _largest_divisor_tile(n_pad, cap=512)

    # Largest K tile (divisor of k_pad) keeping double-buffered x/W^T <= ~8 MiB.
    itemsize = jnp.dtype(compute_dtype).itemsize
    xw_budget = 8 * 1024 * 1024
    tk = 128
    q = k_pad // 128
    for d in range(1, q + 1):
        cand = d * 128
        if q % d == 0 and (tm * cand + cand * tn) * itemsize * 2 <= xw_budget:
            tk = cand

    # v7x megacore: if the grid degenerates to a single (i, j) tile, split N so
    # both TensorCores get work.
    if m_pad // tm == 1 and n_pad // tn == 1 and n_pad >= 256:
        tn = _largest_divisor_tile(n_pad, cap=n_pad // 2)

    # ---- pad x only as needed (no full zero-buffer materialization) --------
    pad_m, pad_k = m_pad - m, k_pad - in_features
    x_p = x2d if (pad_m == 0 and pad_k == 0) else jnp.pad(
        x2d, ((0, pad_m), (0, pad_k)))

    grid = (m_pad // tm, n_pad // tn, k_pad // tk)
    n_steps = grid[0] * grid[1] * grid[2]

    # Deeper pipelining on the streamed operands when tiles are small.
    if tk <= 256 and n_steps >= 3:
        x_spec = pl.BlockSpec((tm, tk), lambda i, j, k: (i, k),
                              pipeline_mode=pl.Buffered(3))
        w_spec = pl.BlockSpec((tk, tn), lambda i, j, k: (k, j),
                              pipeline_mode=pl.Buffered(3))
    else:
        x_spec = pl.BlockSpec((tm, tk), lambda i, j, k: (i, k))
        w_spec = pl.BlockSpec((tk, tn), lambda i, j, k: (k, j))

    compiler_params = pltpu.CompilerParams(
        dimension_semantics=("parallel", "parallel", "arbitrary"))

    if at is None:
        # Merged-LoRA fast path: plain matmul + bias.
        out = pl.pallas_call(
            _linear_bias_kernel,
            out_shape=jax.ShapeDtypeStruct((m_pad, n_pad), out_dtype),
            grid_spec=pltpu.PrefetchScalarGridSpec(
                num_scalar_prefetch=0,
                grid=grid,
                in_specs=[x_spec, w_spec,
                          pl.BlockSpec((1, tn), lambda i, j, k: (0, j))],
                out_specs=pl.BlockSpec((tm, tn), lambda i, j, k: (i, j)),
                scratch_shapes=[pltpu.VMEM((tm, tn), jnp.float32)]),
            compiler_params=compiler_params,
        )(x_p, wt, b2)
        return out[:m, :out_features].reshape(*lead, out_features)

    r_pad = at.shape[1]

    # ---- pass 1: LoRA down-projection z = x @ A^T (hoisted out of N loop) ---
    z = pl.pallas_call(
        _lora_down_kernel,
        out_shape=jax.ShapeDtypeStruct((m_pad, r_pad), jnp.float32),
        grid_spec=pltpu.PrefetchScalarGridSpec(
            num_scalar_prefetch=0,
            grid=(m_pad // tm, k_pad // tk),
            in_specs=[pl.BlockSpec((tm, tk), lambda i, k: (i, k)),
                      pl.BlockSpec((tk, r_pad), lambda i, k: (k, 0))],
            out_specs=pl.BlockSpec((tm, r_pad), lambda i, k: (i, 0))),
        compiler_params=pltpu.CompilerParams(
            dimension_semantics=("parallel", "arbitrary")),
    )(x_p, at)

    # ---- pass 2: main matmul + bias, LoRA up-projection at the last K step --
    out = pl.pallas_call(
        _lora_linear_kernel,
        out_shape=jax.ShapeDtypeStruct((m_pad, n_pad), out_dtype),
        grid_spec=pltpu.PrefetchScalarGridSpec(
            num_scalar_prefetch=0,
            grid=grid,
            in_specs=[
                x_spec,                                              # x
                w_spec,                                              # W^T
                pl.BlockSpec((1, tn), lambda i, j, k: (0, j)),       # bias
                pl.BlockSpec((tm, r_pad), lambda i, j, k: (i, 0)),   # z
                pl.BlockSpec((r_pad, tn), lambda i, j, k: (0, j)),   # B^T
            ],
            out_specs=pl.BlockSpec((tm, tn), lambda i, j, k: (i, j)),
            scratch_shapes=[pltpu.VMEM((tm, tn), jnp.float32)]),
        compiler_params=compiler_params,
    )(x_p, wt, b2, z, bt)

    return out[:m, :out_features].reshape(*lead, out_features)


# --------------------------------------------------------------------------
# Init mirroring the PyTorch module + reference
# --------------------------------------------------------------------------
def init_params(key, in_features, out_features, ab_r, dtype=jnp.float32):
    rank = out_features // ab_r
    k_w, k_b, k_a = jax.random.split(key, 3)

    # nn.Linear default: kaiming_uniform_(a=sqrt(5)) -> U(+-1/sqrt(fan_in))
    bound_fc = 1.0 / (in_features ** 0.5)
    w_fc = jax.random.uniform(k_w, (out_features, in_features), dtype,
                              minval=-bound_fc, maxval=bound_fc)
    b_fc = jax.random.uniform(k_b, (out_features,), dtype,
                              minval=-bound_fc, maxval=bound_fc)

    # LoRA A: kaiming_uniform_(a=sqrt(5)); LoRA B: zeros (module spec).
    bound_a = 1.0 / (in_features ** 0.5)
    w_a = jax.random.uniform(k_a, (rank, in_features), dtype,
                             minval=-bound_a, maxval=bound_a)
    w_b = jnp.zeros((out_features, rank), dtype)
    return w_fc, b_fc, w_a, w_b


def _reference(x, w_fc, b_fc, w_a, w_b):
    return x @ w_fc.T + b_fc + (x @ w_a.T) @ w_b.T


if __name__ == "__main__":
    key = jax.random.PRNGKey(0)
    k_x1, k_p1, k_x2, k_p2, k_b2 = jax.random.split(key, 5)

    # --- Config 1: module-faithful init (LoRA B zero), small shapes, f32 -----
    batch, seq, in_f, out_f, ab_r = 2, 8, 32, 32, 4
    x1 = jax.random.normal(k_x1, (batch, seq, in_f), jnp.float32)
    w_fc1, b_fc1, w_a1, w_b1 = init_params(k_p1, in_f, out_f, ab_r)
    p1 = prepare_lora_linear_params(w_fc1, b_fc1, w_a1, w_b1,
                                    compute_dtype=jnp.float32)
    fn1 = jax.jit(functools.partial(to_qkv_wrapped_with_lora,
                                    out_features=out_f))
    y1 = jax.block_until_ready(fn1(x1, *p1))
    ref1 = _reference(x1, w_fc1, b_fc1, w_a1, w_b1)
    assert y1.shape == (batch, seq, out_f)
    assert jnp.allclose(y1, ref1, atol=1e-4, rtol=1e-4)

    # --- Config 2: K=640 (non-pow2 tk path), nonzero LoRA B, f32 compute -----
    batch2, seq2, in_f2, out_f2, ab_r2 = 2, 24, 640, 256, 4
    rank2 = out_f2 // ab_r2
    x2 = jax.random.normal(k_x2, (batch2, seq2, in_f2), jnp.float32)
    w_fc2, b_fc2, w_a2, _ = init_params(k_p2, in_f2, out_f2, ab_r2)
    w_b2 = jax.random.uniform(k_b2, (out_f2, rank2), jnp.float32,
                              minval=-0.05, maxval=0.05)
    p2 = prepare_lora_linear_params(w_fc2, b_fc2, w_a2, w_b2,
                                    compute_dtype=jnp.float32)
    fn2 = jax.jit(functools.partial(to_qkv_wrapped_with_lora,
                                    out_features=out_f2))
    y2 = jax.block_until_ready(fn2(x2, *p2))
    ref2 = _reference(x2, w_fc2, b_fc2, w_a2, w_b2)
    assert y2.shape == (batch2, seq2, out_f2)
    assert jnp.allclose(y2, ref2, atol=5e-3, rtol=1e-3)

    # --- Config 2 with default bf16 weights/activations (f32 accumulation) ---
    p2_bf16 = prepare_lora_linear_params(w_fc2, b_fc2, w_a2, w_b2)
    y2_bf16 = jax.block_until_ready(fn2(x2, *p2_bf16))
    assert jnp.allclose(y2_bf16, ref2, atol=1e-1, rtol=5e-2)

    # --- Config 2 serving fast path: LoRA merged into W (f32, exact) ---------
    p2_merged = prepare_lora_linear_params(w_fc2, b_fc2, w_a2, w_b2,
                                           compute_dtype=jnp.float32,
                                           merge_lora=True)
    y2_m = jax.block_until_ready(fn2(x2, *p2_merged))
    assert jnp.allclose(y2_m, ref2, atol=5e-3, rtol=1e-3)

    print("KERNEL_OK")
</pallas_src>

<mosaic_0001>
module attributes {stable_mosaic.version = 11 : i64} {
  func.func @_lora_linear_kernel(%arg0: i32, %arg1: i32, %arg2: i32, %arg3: memref<16x128xf32, #tpu.memory_space<vmem>>, %arg4: memref<128x128xf32, #tpu.memory_space<vmem>>, %arg5: memref<1x128xf32, #tpu.memory_space<vmem>>, %arg6: memref<16x128xf32, #tpu.memory_space<vmem>>, %arg7: memref<128x128xf32, #tpu.memory_space<vmem>>, %arg8: memref<16x128xf32, #tpu.memory_space<vmem>>, %arg9: memref<16x128xf32, #tpu.memory_space<vmem>>) attributes {dimension_semantics = [#tpu.dimension_semantics<parallel>, #tpu.dimension_semantics<parallel>, #tpu.dimension_semantics<arbitrary>], iteration_bounds = array<i64: 1, 1, 1>, scalar_prefetch = 0 : i64, scratch_operands = 1 : i64, tpu.core_type = #tpu.core_type<tc>, window_params = [{transform_indices = @transform_0, window_bounds = array<i64: 16, 128>}, {transform_indices = @transform_1, window_bounds = array<i64: 128, 128>}, {transform_indices = @transform_2, window_bounds = array<i64: 1, 128>}, {transform_indices = @transform_3, window_bounds = array<i64: 16, 128>}, {transform_indices = @transform_4, window_bounds = array<i64: 128, 128>}, {transform_indices = @transform_5, window_bounds = array<i64: 16, 128>}]} {
    %c0_i32 = arith.constant 0 : i32
    %0 = arith.cmpi eq, %arg2, %c0_i32 : i32
    %1 = arith.extui %0 : i1 to i32
    %c0_i32_0 = arith.constant 0 : i32
    %2 = arith.cmpi ne, %1, %c0_i32_0 : i32
    scf.if %2 {
      %c0_10 = arith.constant 0 : index
      %c0_11 = arith.constant 0 : index
      %12 = vector.load %arg5[%c0_10, %c0_11] : memref<1x128xf32, #tpu.memory_space<vmem>>, vector<1x128xf32>
      %13 = vector.shape_cast %12 : vector<1x128xf32> to vector<1x128xf32>
      %14 = vector.broadcast %13 : vector<1x128xf32> to vector<16x128xf32>
      %c0_12 = arith.constant 0 : index
      %c0_13 = arith.constant 0 : index
      %15 = vector.load %arg9[%c0_12, %c0_13] : memref<16x128xf32, #tpu.memory_space<vmem>>, vector<16x128xf32>
      tpu.vector_store %arg9[%c0_12, %c0_13], %14 {strides = array<i32>} : memref<16x128xf32, #tpu.memory_space<vmem>>, vector<16x128xf32>,
    } else {
    }
    %c0 = arith.constant 0 : index
    %c0_1 = arith.constant 0 : index
    %3 = vector.load %arg9[%c0, %c0_1] : memref<16x128xf32, #tpu.memory_space<vmem>>, vector<16x128xf32>
    %c0_2 = arith.constant 0 : index
    %c0_3 = arith.constant 0 : index
    %4 = vector.load %arg3[%c0_2, %c0_3] : memref<16x128xf32, #tpu.memory_space<vmem>>, vector<16x128xf32>
    %c0_4 = arith.constant 0 : index
    %c0_5 = arith.constant 0 : index
    %5 = vector.load %arg4[%c0_4, %c0_5] : memref<128x128xf32, #tpu.memory_space<vmem>>, vector<128x128xf32>
    %cst = arith.constant dense<0.000000e+00> : vector<16x128xf32>
    %6 = tpu.matmul %4, %5, %cst {dimension_numbers = #tpu.dot_dimension_numbers<[1], [0], [0], [1], [0, 0, 1, 1], [], []>} : vector<16x128xf32>, vector<128x128xf32>, vector<16x128xf32> -> vector<16x128xf32>
    %7 = arith.addf %3, %6 : vector<16x128xf32>
    %c0_6 = arith.constant 0 : index
    %c0_7 = arith.constant 0 : index
    %8 = vector.load %arg9[%c0_6, %c0_7] : memref<16x128xf32, #tpu.memory_space<vmem>>, vector<16x128xf32>
    tpu.vector_store %arg9[%c0_6, %c0_7], %7 {strides = array<i32>} : memref<16x128xf32, #tpu.memory_space<vmem>>, vector<16x128xf32>,
    %c0_i32_8 = arith.constant 0 : i32
    %9 = arith.cmpi eq, %arg2, %c0_i32_8 : i32
    %10 = arith.extui %9 : i1 to i32
    %c0_i32_9 = arith.constant 0 : i32
    %11 = arith.cmpi ne, %10, %c0_i32_9 : i32
    scf.if %11 {
      %c0_10 = arith.constant 0 : index
      %c0_11 = arith.constant 0 : index
      %12 = vector.load %arg6[%c0_10, %c0_11] : memref<16x128xf32, #tpu.memory_space<vmem>>, vector<16x128xf32>
      %c0_12 = arith.constant 0 : index
      %c0_13 = arith.constant 0 : index
      %13 = vector.load %arg7[%c0_12, %c0_13] : memref<128x128xf32, #tpu.memory_space<vmem>>, vector<128x128xf32>
      %cst_14 = arith.constant dense<0.000000e+00> : vector<16x128xf32>
      %14 = tpu.matmul %12, %13, %cst_14 {dimension_numbers = #tpu.dot_dimension_numbers<[1], [0], [0], [1], [0, 0, 1, 1], [], []>} : vector<16x128xf32>, vector<128x128xf32>, vector<16x128xf32> -> vector<16x128xf32>
      %c0_15 = arith.constant 0 : index
      %c0_16 = arith.constant 0 : index
      %15 = vector.load %arg9[%c0_15, %c0_16] : memref<16x128xf32, #tpu.memory_space<vmem>>, vector<16x128xf32>
      %16 = arith.addf %15, %14 : vector<16x128xf32>
      %c0_17 = arith.constant 0 : index
      %c0_18 = arith.constant 0 : index
      %17 = vector.load %arg8[%c0_17, %c0_18] : memref<16x128xf32, #tpu.memory_space<vmem>>, vector<16x128xf32>
      tpu.vector_store %arg8[%c0_17, %c0_18], %16 {strides = array<i32>} : memref<16x128xf32, #tpu.memory_space<vmem>>, vector<16x128xf32>,
    } else {
    }
    return
  }
  func.func @transform_0(%arg0: i32, %arg1: i32, %arg2: i32) -> (i32, i32) {
    %c0_i32 = arith.constant 0 : i32
    return %arg0, %arg2 : i32, i32
  }
  func.func @transform_1(%arg0: i32, %arg1: i32, %arg2: i32) -> (i32, i32) {
    %c0_i32 = arith.constant 0 : i32
    return %arg2, %arg1 : i32, i32
  }
  func.func @transform_2(%arg0: i32, %arg1: i32, %arg2: i32) -> (i32, i32) {
    %c0_i32 = arith.constant 0 : i32
    %c0_i32_0 = arith.constant 0 : i32
    return %c0_i32, %arg1 : i32, i32
  }
  func.func @transform_3(%arg0: i32, %arg1: i32, %arg2: i32) -> (i32, i32) {
    %c0_i32 = arith.constant 0 : i32
    %c0_i32_0 = arith.constant 0 : i32
    return %arg0, %c0_i32 : i32, i32
  }
  func.func @transform_4(%arg0: i32, %arg1: i32, %arg2: i32) -> (i32, i32) {
    %c0_i32 = arith.constant 0 : i32
    %c0_i32_0 = arith.constant 0 : i32
    return %c0_i32, %arg1 : i32, i32
  }
  func.func @transform_5(%arg0: i32, %arg1: i32, %arg2: i32) -> (i32, i32) {
    %c0_i32 = arith.constant 0 : i32
    return %arg0, %arg1 : i32, i32
  }
}

module attributes {stable_mosaic.version = 11 : i64} {
  func.func @_lora_down_kernel(%arg0: i32, %arg1: i32, %arg2: memref<16x128xf32, #tpu.memory_space<vmem>>, %arg3: memref<128x128xf32, #tpu.memory_space<vmem>>, %arg4: memref<16x128xf32, #tpu.memory_space<vmem>>) attributes {dimension_semantics = [#tpu.dimension_semantics<parallel>, #tpu.dimension_semantics<arbitrary>], iteration_bounds = array<i64: 1, 1>, scalar_prefetch = 0 : i64, scratch_operands = 0 : i64, tpu.core_type = #tpu.core_type<tc>, window_params = [{transform_indices = @transform_0, window_bounds = array<i64: 16, 128>}, {transform_indices = @transform_1, window_bounds = array<i64: 128, 128>}, {transform_indices = @transform_2, window_bounds = array<i64: 16, 128>}]} {
    %c0_i32 = arith.constant 0 : i32
    %0 = arith.cmpi eq, %arg1, %c0_i32 : i32
    %1 = arith.extui %0 : i1 to i32
    %c0_i32_0 = arith.constant 0 : i32
    %2 = arith.cmpi ne, %1, %c0_i32_0 : i32
    scf.if %2 {
      %cst_8 = arith.constant 0.000000e+00 : f32
      %9 = vector.broadcast %cst_8 : f32 to vector<16x128xf32>
      %c0_9 = arith.constant 0 : index
      %c0_10 = arith.constant 0 : index
      %10 = vector.load %arg4[%c0_9, %c0_10] : memref<16x128xf32, #tpu.memory_space<vmem>>, vector<16x128xf32>
      tpu.vector_store %arg4[%c0_9, %c0_10], %9 {strides = array<i32>} : memref<16x128xf32, #tpu.memory_space<vmem>>, vector<16x128xf32>,
    } else {
    }
    %c0 = arith.constant 0 : index
    %c0_1 = arith.constant 0 : index
    %3 = vector.load %arg4[%c0, %c0_1] : memref<16x128xf32, #tpu.memory_space<vmem>>, vector<16x128xf32>
    %c0_2 = arith.constant 0 : index
    %c0_3 = arith.constant 0 : index
    %4 = vector.load %arg2[%c0_2, %c0_3] : memref<16x128xf32, #tpu.memory_space<vmem>>, vector<16x128xf32>
    %c0_4 = arith.constant 0 : index
    %c0_5 = arith.constant 0 : index
    %5 = vector.load %arg3[%c0_4, %c0_5] : memref<128x128xf32, #tpu.memory_space<vmem>>, vector<128x128xf32>
    %cst = arith.constant dense<0.000000e+00> : vector<16x128xf32>
    %6 = tpu.matmul %4, %5, %cst {dimension_numbers = #tpu.dot_dimension_numbers<[1], [0], [0], [1], [0, 0, 1, 1], [], []>} : vector<16x128xf32>, vector<128x128xf32>, vector<16x128xf32> -> vector<16x128xf32>
    %7 = arith.addf %3, %6 : vector<16x128xf32>
    %c0_6 = arith.constant 0 : index
    %c0_7 = arith.constant 0 : index
    %8 = vector.load %arg4[%c0_6, %c0_7] : memref<16x128xf32, #tpu.memory_space<vmem>>, vector<16x128xf32>
    tpu.vector_store %arg4[%c0_6, %c0_7], %7 {strides = array<i32>} : memref<16x128xf32, #tpu.memory_space<vmem>>, vector<16x128xf32>,
    return
  }
  func.func @transform_0(%arg0: i32, %arg1: i32) -> (i32, i32) {
    %c0_i32 = arith.constant 0 : i32
    return %arg0, %arg1 : i32, i32
  }
  func.func @transform_1(%arg0: i32, %arg1: i32) -> (i32, i32) {
    %c0_i32 = arith.constant 0 : i32
    %c0_i32_0 = arith.constant 0 : i32
    return %arg1, %c0_i32 : i32, i32
  }
  func.func @transform_2(%arg0: i32, %arg1: i32) -> (i32, i32) {
    %c0_i32 = arith.constant 0 : i32
    %c0_i32_0 = arith.constant 0 : i32
    return %arg0, %c0_i32 : i32, i32
  }
}

</mosaic_0001>

<llo_original>
// kernel: to_qkv_wrapped_with_lora.2
$region0: #{to_qkv_wrapped_with_lora.2}
  #allocation0 [shape = 'u32[]', space=smem, size = 0x4, offset = 0x4, fixed_abs, tag = 'smem constant byte address 0x4 - core index']
  #allocation1 [shape = 'u32[144,128]{1,0:T(1,128)}', space=vmem, size = 0x12000, scoped, tag = 'internal scratch']
  %s0 = inlined_call_operand.vmem [shape: f32[16,128], index: 0, kind: input, shape index: {}]
  %s1 = inlined_call_operand.hbm [shape: f32[128,128], index: 1, kind: input, shape index: {}]
  %s2 = inlined_call_operand.vmem [shape: f32[16,128], index: 2, kind: output, shape index: {}]
  %s3 = sld [smem:[#allocation0]]
  $region26: #{to_qkv_wrapped_with_lora.2} parent=0
    _
  %s5 = ssub.s32 1, %s3
  %s6 = scalar_select 0, %s5, %s3
  $region1: #{to_qkv_wrapped_with_lora.2} parent=0
    #allocation2 [shape = 'u8[65536]{0}', space=vmem, size = 0x10000, scoped, tag = 'input window, operand 1, single buffered']
    #allocation3 [shape = 's32[1]{0}', space=sflag, size = 0x4, scoped, tag = 'scoped memory for to_qkv_wrapped_with_lora.2']
    %7 = vsyncpa [#allocation3], 0
    // Predicated region
    $region2: #{to_qkv_wrapped_with_lora.2} parent=1 // pred_check
      _
    $region3: #{to_qkv_wrapped_with_lora.2} parent=1 // pred_check_branch
      %9 = sbr.rel (0) target = $region5
    $region4: #{to_qkv_wrapped_with_lora.2} parent=1 // pred_region
      _
    $region5: #{to_qkv_wrapped_with_lora.2} parent=1 // pred_fallthru
      _
    // Predicated region
    $region6: #{to_qkv_wrapped_with_lora.2} parent=1 // pred_check
      _
    $region7: #{to_qkv_wrapped_with_lora.2} parent=1 // pred_check_branch
      %11 = sbr.rel (0) target = $region9
    $region8: #{to_qkv_wrapped_with_lora.2} parent=1 // pred_region
      %s13 = ssub.s32 2048, 2048
      %14 = vsyncadd [#allocation3], %s13
      %s15 = sshll.u32 [#allocation2], 4
      %s16 = int_to_ptr.vmem [resolvable:$true] %s15
      %21 = dma.hbm_to_vmem [thread:$0]  %s1, 2048, %s16, [#allocation3], 128, 128, 8
    $region9: #{to_qkv_wrapped_with_lora.2} parent=1 // pred_fallthru
      _
    // Predicated region
    $region10: #{to_qkv_wrapped_with_lora.2} parent=1 // pred_check
      _
    $region11: #{to_qkv_wrapped_with_lora.2} parent=1 // pred_check_branch
      %23 = sbr.rel (0) target = $region13
    $region12: #{to_qkv_wrapped_with_lora.2} parent=1 // pred_region
      %24 = dma.done [#allocation3], 2048
    $region13: #{to_qkv_wrapped_with_lora.2} parent=1 // pred_fallthru
      _
    %p25 = scmp.eq.s32.totalorder 0, 0
    // Predicated region
    $region14: #{to_qkv_wrapped_with_lora.2} parent=1 // pred_check
      %p26 = pneg %p25
    $region15: #{to_qkv_wrapped_with_lora.2} parent=1 // pred_check_branch
      %28 = sbr.rel (%p26) target = $region17
    $region16: #{to_qkv_wrapped_with_lora.2} parent=1 // pred_region
      %29 = vst [vmem:[%s2] sm:$0xff] 0.0
      %30 = vst [vmem:[%s2 + $0x8] sm:$0xff] 0.0
    $region17: #{to_qkv_wrapped_with_lora.2} parent=1 // pred_fallthru
      _
    %v31 = vld [vmem:[%s2] sm:$0xff]
    %v32 = vld [vmem:[%s2 + $0x8] sm:$0xff]
    %v33 = vld [vmem:[%s0] sm:$0xff]
    %v34 = vld [vmem:[%s0 + $0x8] sm:$0xff]
    %v35 = vld [vmem:[#allocation2] sm:$0xff]
    %v36 = vld [vmem:[#allocation2 + $0x8] sm:$0xff]
    %v37 = vld [vmem:[#allocation2 + $0x10] sm:$0xff]
    %v38 = vld [vmem:[#allocation2 + $0x18] sm:$0xff]
    %v39 = vld [vmem:[#allocation2 + $0x20] sm:$0xff]
    %v40 = vld [vmem:[#allocation2 + $0x28] sm:$0xff]
    %v41 = vld [vmem:[#allocation2 + $0x30] sm:$0xff]
    %v42 = vld [vmem:[#allocation2 + $0x38] sm:$0xff]
    %v43 = vld [vmem:[#allocation2 + $0x40] sm:$0xff]
    %v44 = vld [vmem:[#allocation2 + $0x48] sm:$0xff]
    %v45 = vld [vmem:[#allocation2 + $0x50] sm:$0xff]
    %v46 = vld [vmem:[#allocation2 + $0x58] sm:$0xff]
    %v47 = vld [vmem:[#allocation2 + $0x60] sm:$0xff]
    %v48 = vld [vmem:[#allocation2 + $0x68] sm:$0xff]
    %v49 = vld [vmem:[#allocation2 + $0x70] sm:$0xff]
    %v50 = vld [vmem:[#allocation2 + $0x78] sm:$0xff]
    %51 = vmatprep.subr.mxu0 0.0
    %52 = vmatpush1.msra.mxu0 %v35
    %53 = vmatprep.subr.mxu0 0.0
    %54 = vmatpush1.msra.mxu0 %v36
    %55 = vmatprep.subr.mxu0 0.0
    %56 = vmatpush1.msra.mxu0 %v37
    %57 = vmatprep.subr.mxu0 0.0
    %58 = vmatpush1.msra.mxu0 %v38
    %59 = vmatprep.subr.mxu0 0.0
    %60 = vmatpush1.msra.mxu0 %v39
    %61 = vmatprep.subr.mxu0 0.0
    %62 = vmatpush1.msra.mxu0 %v40
    %63 = vmatprep.subr.mxu0 0.0
    %64 = vmatpush1.msra.mxu0 %v41
    %65 = vmatprep.subr.mxu0 0.0
    %66 = vmatpush1.msra.mxu0 %v42
    %67 = vmatprep.subr.mxu0 0.0
    %68 = vmatpush1.msra.mxu0 %v43
    %69 = vmatprep.subr.mxu0 0.0
    %70 = vmatpush1.msra.mxu0 %v44
    %71 = vmatprep.subr.mxu0 0.0
    %72 = vmatpush1.msra.mxu0 %v45
    %73 = vmatprep.subr.mxu0 0.0
    %74 = vmatpush1.msra.mxu0 %v46
    %75 = vmatprep.subr.mxu0 0.0
    %76 = vmatpush1.msra.mxu0 %v47
    %77 = vmatprep.subr.mxu0 0.0
    %78 = vmatpush1.msra.mxu0 %v48
    %79 = vmatprep.subr.mxu0 0.0
    %80 = vmatpush1.msra.mxu0 %v49
    %81 = vmatprep.subr.mxu0 0.0
    %82 = vmatpush1.msra.mxu0 %v50
    %83 = vmatprep.subr.mxu0 0.0
    %84 = vmatpush1.msra.mxu0 0.0
    %85 = vmatprep.subr.mxu0 0.0
    %86 = vmatpush1.msra.mxu0 0.0
    %87 = vmatprep.subr.mxu0 0.0
    %88 = vmatpush1.msra.mxu0 0.0
    %89 = vmatprep.subr.mxu0 0.0
    %90 = vmatpush1.msra.mxu0 0.0
    %91 = vmatprep.subr.mxu0 0.0
    %92 = vmatpush1.msra.mxu0 0.0
    %93 = vmatprep.subr.mxu0 0.0
    %94 = vmatpush1.msra.mxu0 0.0
    %95 = vmatprep.subr.mxu0 0.0
    %96 = vmatpush1.msra.mxu0 0.0
    %97 = vmatprep.subr.mxu0 0.0
    %98 = vmatpush1.msra.mxu0 0.0
    %99 = vmatprep.subr.mxu0 0.0
    %100 = vmatpush1.msra.mxu0 0.0
    %101 = vmatprep.subr.mxu0 0.0
    %102 = vmatpush1.msra.mxu0 0.0
    %103 = vmatprep.subr.mxu0 0.0
    %104 = vmatpush1.msra.mxu0 0.0
    %105 = vmatprep.subr.mxu0 0.0
    %106 = vmatpush1.msra.mxu0 0.0
    %107 = vmatprep.subr.mxu0 0.0
    %108 = vmatpush1.msra.mxu0 0.0
    %109 = vmatprep.subr.mxu0 0.0
    %110 = vmatpush1.msra.mxu0 0.0
    %111 = vmatprep.subr.mxu0 0.0
    %112 = vmatpush1.msra.mxu0 0.0
    %113 = vmatprep.subr.mxu0 0.0
    %114 = vmatpush1.msra.mxu0 0.0
    %115 = vmatprep.mubr.f32.mxu0 0.0
    %116 = vmatmul.mubr.f32.gmra.mrb[0].mxu0 %v33
    %v117 = vpop.f32.mrb[0].mxu0
    %v118 = vadd.f32 0.0, %v117
    %v119 = vpop.f32.mrb[0].mxu0
    %120 = vmatprep.mubr.f32.mxu0 0.0
    %121 = vmatmul.mubr.f32.gmra.mrb[0].mxu0 %v34
    %v122 = vpop.f32.mrb[0].mxu0
    %v123 = vadd.f32 0.0, %v122
    %v124 = vpop.f32.mrb[0].mxu0
    %125 = vdwg.mxu0
    %v126 = vadd.f32 %v31, %v118
    %v127 = vadd.f32 %v32, %v123
    %128 = vst [vmem:[%s2] sm:$0xff] %v126
    %129 = vst [vmem:[%s2 + $0x8] sm:$0xff] %v127
    // Predicated region
    $region18: #{to_qkv_wrapped_with_lora.2} parent=1 // pred_check
      _
    $region19: #{to_qkv_wrapped_with_lora.2} parent=1 // pred_check_branch
      %131 = sbr.rel (0) target = $region21
    $region20: #{to_qkv_wrapped_with_lora.2} parent=1 // pred_region
      _
    $region21: #{to_qkv_wrapped_with_lora.2} parent=1 // pred_fallthru
      _
    // Predicated region
    $region22: #{to_qkv_wrapped_with_lora.2} parent=1 // pred_check
      _
    $region23: #{to_qkv_wrapped_with_lora.2} parent=1 // pred_check_branch
      %133 = sbr.rel (0) target = $region25
    $region24: #{to_qkv_wrapped_with_lora.2} parent=1 // pred_region
      _
    $region25: #{to_qkv_wrapped_with_lora.2} parent=1 // pred_fallthru
      _
    %134 = vsyncpa [#allocation3], 1

// kernel: to_qkv_wrapped_with_lora.3
$region0: #{to_qkv_wrapped_with_lora.3}
  #allocation0 [shape = 'u32[]', space=smem, size = 0x4, offset = 0x4, fixed_abs, tag = 'smem constant byte address 0x4 - core index']
  #allocation1 [shape = 'u32[144,128]{1,0:T(1,128)}', space=vmem, size = 0x12000, scoped, tag = 'internal scratch']
  #allocation2 [shape = 'f32[16,128]{1,0:T(8,128)}', space=vmem, size = 0x2000, scoped, tag = 'scratch operand']
  %s0 = inlined_call_operand.vmem [shape: f32[16,128], index: 0, kind: input, shape index: {}]
  %s1 = inlined_call_operand.vmem [shape: f32[128,128], index: 1, kind: input, shape index: {}]
  %s2 = inlined_call_operand.vmem [shape: f32[1,128], index: 2, kind: input, shape index: {}]
  %s3 = inlined_call_operand.vmem [shape: f32[16,128], index: 3, kind: input, shape index: {}]
  %s4 = inlined_call_operand.hbm [shape: f32[128,128], index: 4, kind: input, shape index: {}]
  %s5 = inlined_call_operand.vmem [shape: f32[16,128], index: 5, kind: output, shape index: {}]
  %s6 = sld [smem:[#allocation0]]
  $region42: #{to_qkv_wrapped_with_lora.3} parent=0
    _
  %s8 = ssub.s32 1, %s6
  %s9 = scalar_select 0, %s8, %s6
  $region1: #{to_qkv_wrapped_with_lora.3} parent=0
    #allocation3 [shape = 'u8[65536]{0}', space=vmem, size = 0x10000, scoped, tag = 'input window, operand 4, single buffered']
    #allocation4 [shape = 's32[1]{0}', space=sflag, size = 0x4, scoped, tag = 'scoped memory for to_qkv_wrapped_with_lora.3']
    %10 = vsyncpa [#allocation4], 0
    // Predicated region
    $region2: #{to_qkv_wrapped_with_lora.3} parent=1 // pred_check
      _
    $region3: #{to_qkv_wrapped_with_lora.3} parent=1 // pred_check_branch
      %12 = sbr.rel (0) target = $region5
    $region4: #{to_qkv_wrapped_with_lora.3} parent=1 // pred_region
      _
    $region5: #{to_qkv_wrapped_with_lora.3} parent=1 // pred_fallthru
      _
    // Predicated region
    $region6: #{to_qkv_wrapped_with_lora.3} parent=1 // pred_check
      _
    $region7: #{to_qkv_wrapped_with_lora.3} parent=1 // pred_check_branch
      %14 = sbr.rel (0) target = $region9
    $region8: #{to_qkv_wrapped_with_lora.3} parent=1 // pred_region
      _
    $region9: #{to_qkv_wrapped_with_lora.3} parent=1 // pred_fallthru
      _
    // Predicated region
    $region10: #{to_qkv_wrapped_with_lora.3} parent=1 // pred_check
      _
    $region11: #{to_qkv_wrapped_with_lora.3} parent=1 // pred_check_branch
      %16 = sbr.rel (0) target = $region13
    $region12: #{to_qkv_wrapped_with_lora.3} parent=1 // pred_region
      _
    $region13: #{to_qkv_wrapped_with_lora.3} parent=1 // pred_fallthru
      _
    // Predicated region
    $region14: #{to_qkv_wrapped_with_lora.3} parent=1 // pred_check
      _
    $region15: #{to_qkv_wrapped_with_lora.3} parent=1 // pred_check_branch
      %18 = sbr.rel (0) target = $region17
    $region16: #{to_qkv_wrapped_with_lora.3} parent=1 // pred_region
      _
    $region17: #{to_qkv_wrapped_with_lora.3} parent=1 // pred_fallthru
      _
    // Predicated region
    $region18: #{to_qkv_wrapped_with_lora.3} parent=1 // pred_check
      _
    $region19: #{to_qkv_wrapped_with_lora.3} parent=1 // pred_check_branch
      %20 = sbr.rel (0) target = $region21
    $region20: #{to_qkv_wrapped_with_lora.3} parent=1 // pred_region
      %s22 = ssub.s32 2048, 2048
      %23 = vsyncadd [#allocation4], %s22
      %s24 = sshll.u32 [#allocation3], 4
      %s25 = int_to_ptr.vmem [resolvable:$true] %s24
      %30 = dma.hbm_to_vmem [thread:$0]  %s4, 2048, %s25, [#allocation4], 128, 128, 8
    $region21: #{to_qkv_wrapped_with_lora.3} parent=1 // pred_fallthru
      _
    // Predicated region
    $region22: #{to_qkv_wrapped_with_lora.3} parent=1 // pred_check
      _
    $region23: #{to_qkv_wrapped_with_lora.3} parent=1 // pred_check_branch
      %32 = sbr.rel (0) target = $region25
    $region24: #{to_qkv_wrapped_with_lora.3} parent=1 // pred_region
      %33 = dma.done [#allocation4], 2048
    $region25: #{to_qkv_wrapped_with_lora.3} parent=1 // pred_fallthru
      _
    %p34 = scmp.eq.s32.totalorder 0, 0
    // Predicated region
    $region26: #{to_qkv_wrapped_with_lora.3} parent=1 // pred_check
      %p35 = pneg %p34
    $region27: #{to_qkv_wrapped_with_lora.3} parent=1 // pred_check_branch
      %37 = sbr.rel (%p35) target = $region29
    $region28: #{to_qkv_wrapped_with_lora.3} parent=1 // pred_region
      %v38 = vld [vmem:[%s2] sm:$0x1]
      %v40 = vlaneseq
      %v41 = vshrl.u32 %v40, 7
      %v42 = vsub.s32 0, %v41
      %v43 = vrot.slane %v38, %v42
      %45 = vst [vmem:[#allocation2] sm:$0xff] %v43
      %46 = vst [vmem:[#allocation2 + $0x8] sm:$0xff] %v43
    $region29: #{to_qkv_wrapped_with_lora.3} parent=1 // pred_fallthru
      _
    %v47 = vld [vmem:[#allocation2] sm:$0xff]
    %v48 = vld [vmem:[#allocation2 + $0x8] sm:$0xff]
    %v49 = vld [vmem:[%s0] sm:$0xff]
    %v50 = vld [vmem:[%s0 + $0x8] sm:$0xff]
    %v51 = vld [vmem:[%s1] sm:$0xff]
    %v52 = vld [vmem:[%s1 + $0x8] sm:$0xff]
    %v53 = vld [vmem:[%s1 + $0x10] sm:$0xff]
    %v54 = vld [vmem:[%s1 + $0x18] sm:$0xff]
    %v55 = vld [vmem:[%s1 + $0x20] sm:$0xff]
    %v56 = vld [vmem:[%s1 + $0x28] sm:$0xff]
    %v57 = vld [vmem:[%s1 + $0x30] sm:$0xff]
    %v58 = vld [vmem:[%s1 + $0x38] sm:$0xff]
    %v59 = vld [vmem:[%s1 + $0x40] sm:$0xff]
    %v60 = vld [vmem:[%s1 + $0x48] sm:$0xff]
    %v61 = vld [vmem:[%s1 + $0x50] sm:$0xff]
    %v62 = vld [vmem:[%s1 + $0x58] sm:$0xff]
    %v63 = vld [vmem:[%s1 + $0x60] sm:$0xff]
    %v64 = vld [vmem:[%s1 + $0x68] sm:$0xff]
    %v65 = vld [vmem:[%s1 + $0x70] sm:$0xff]
    %v66 = vld [vmem:[%s1 + $0x78] sm:$0xff]
    %67 = vmatprep.subr.mxu0 0.0
    %68 = vmatpush1.msra.mxu0 %v51
    %69 = vmatprep.subr.mxu0 0.0
    %70 = vmatpush1.msra.mxu0 %v52
    %71 = vmatprep.subr.mxu0 0.0
    %72 = vmatpush1.msra.mxu0 %v53
    %73 = vmatprep.subr.mxu0 0.0
    %74 = vmatpush1.msra.mxu0 %v54
    %75 = vmatprep.subr.mxu0 0.0
    %76 = vmatpush1.msra.mxu0 %v55
    %77 = vmatprep.subr.mxu0 0.0
    %78 = vmatpush1.msra.mxu0 %v56
    %79 = vmatprep.subr.mxu0 0.0
    %80 = vmatpush1.msra.mxu0 %v57
    %81 = vmatprep.subr.mxu0 0.0
    %82 = vmatpush1.msra.mxu0 %v58
    %83 = vmatprep.subr.mxu0 0.0
    %84 = vmatpush1.msra.mxu0 %v59
    %85 = vmatprep.subr.mxu0 0.0
    %86 = vmatpush1.msra.mxu0 %v60
    %87 = vmatprep.subr.mxu0 0.0
    %88 = vmatpush1.msra.mxu0 %v61
    %89 = vmatprep.subr.mxu0 0.0
    %90 = vmatpush1.msra.mxu0 %v62
    %91 = vmatprep.subr.mxu0 0.0
    %92 = vmatpush1.msra.mxu0 %v63
    %93 = vmatprep.subr.mxu0 0.0
    %94 = vmatpush1.msra.mxu0 %v64
    %95 = vmatprep.subr.mxu0 0.0
    %96 = vmatpush1.msra.mxu0 %v65
    %97 = vmatprep.subr.mxu0 0.0
    %98 = vmatpush1.msra.mxu0 %v66
    %99 = vmatprep.subr.mxu0 0.0
    %100 = vmatpush1.msra.mxu0 0.0
    %101 = vmatprep.subr.mxu0 0.0
    %102 = vmatpush1.msra.mxu0 0.0
    %103 = vmatprep.subr.mxu0 0.0
    %104 = vmatpush1.msra.mxu0 0.0
    %105 = vmatprep.subr.mxu0 0.0
    %106 = vmatpush1.msra.mxu0 0.0
    %107 = vmatprep.subr.mxu0 0.0
    %108 = vmatpush1.msra.mxu0 0.0
    %109 = vmatprep.subr.mxu0 0.0
    %110 = vmatpush1.msra.mxu0 0.0
    %111 = vmatprep.subr.mxu0 0.0
    %112 = vmatpush1.msra.mxu0 0.0
    %113 = vmatprep.subr.mxu0 0.0
    %114 = vmatpush1.msra.mxu0 0.0
    %115 = vmatprep.subr.mxu0 0.0
    %116 = vmatpush1.msra.mxu0 0.0
    %117 = vmatprep.subr.mxu0 0.0
    %118 = vmatpush1.msra.mxu0 0.0
    %119 = vmatprep.subr.mxu0 0.0
    %120 = vmatpush1.msra.mxu0 0.0
    %121 = vmatprep.subr.mxu0 0.0
    %122 = vmatpush1.msra.mxu0 0.0
    %123 = vmatprep.subr.mxu0 0.0
    %124 = vmatpush1.msra.mxu0 0.0
    %125 = vmatprep.subr.mxu0 0.0
    %126 = vmatpush1.msra.mxu0 0.0
    %127 = vmatprep.subr.mxu0 0.0
    %128 = vmatpush1.msra.mxu0 0.0
    %129 = vmatprep.subr.mxu0 0.0
    %130 = vmatpush1.msra.mxu0 0.0
    %131 = vmatprep.mubr.f32.mxu0 0.0
    %132 = vmatmul.mubr.f32.gmra.mrb[0].mxu0 %v49
    %v133 = vpop.f32.mrb[0].mxu0
    %v134 = vadd.f32 0.0, %v133
    %v135 = vpop.f32.mrb[0].mxu0
    %136 = vmatprep.mubr.f32.mxu0 0.0
    %137 = vmatmul.mubr.f32.gmra.mrb[0].mxu0 %v50
    %v138 = vpop.f32.mrb[0].mxu0
    %v139 = vadd.f32 0.0, %v138
    %v140 = vpop.f32.mrb[0].mxu0
    %141 = vdwg.mxu0
    %v142 = vadd.f32 %v47, %v134
    %v143 = vadd.f32 %v48, %v139
    %144 = vst [vmem:[#allocation2] sm:$0xff] %v142
    %145 = vst [vmem:[#allocation2 + $0x8] sm:$0xff] %v143
    // Predicated region
    $region30: #{to_qkv_wrapped_with_lora.3} parent=1 // pred_check
      %p146 = pneg %p34
    $region31: #{to_qkv_wrapped_with_lora.3} parent=1 // pred_check_branch
      %148 = sbr.rel (%p146) target = $region33
    $region32: #{to_qkv_wrapped_with_lora.3} parent=1 // pred_region
      %v149 = vld [vmem:[%s3] sm:$0xff]
      %v150 = vld [vmem:[%s3 + $0x8] sm:$0xff]
      %v151 = vld [vmem:[#allocation3] sm:$0xff]
      %v152 = vld [vmem:[#allocation3 + $0x8] sm:$0xff]
      %v153 = vld [vmem:[#allocation3 + $0x10] sm:$0xff]
      %v154 = vld [vmem:[#allocation3 + $0x18] sm:$0xff]
      %v155 = vld [vmem:[#allocation3 + $0x20] sm:$0xff]
      %v156 = vld [vmem:[#allocation3 + $0x28] sm:$0xff]
      %v157 = vld [vmem:[#allocation3 + $0x30] sm:$0xff]
      %v158 = vld [vmem:[#allocation3 + $0x38] sm:$0xff]
      %v159 = vld [vmem:[#allocation3 + $0x40] sm:$0xff]
      %v160 = vld [vmem:[#allocation3 + $0x48] sm:$0xff]
      %v161 = vld [vmem:[#allocation3 + $0x50] sm:$0xff]
      %v162 = vld [vmem:[#allocation3 + $0x58] sm:$0xff]
      %v163 = vld [vmem:[#allocation3 + $0x60] sm:$0xff]
      %v164 = vld [vmem:[#allocation3 + $0x68] sm:$0xff]
      %v165 = vld [vmem:[#allocation3 + $0x70] sm:$0xff]
      %v166 = vld [vmem:[#allocation3 + $0x78] sm:$0xff]
      %167 = vmatprep.subr.mxu0 0.0
      %168 = vmatpush1.msra.mxu0 %v151
      %169 = vmatprep.subr.mxu0 0.0
      %170 = vmatpush1.msra.mxu0 %v152
      %171 = vmatprep.subr.mxu0 0.0
      %172 = vmatpush1.msra.mxu0 %v153
      %173 = vmatprep.subr.mxu0 0.0
      %174 = vmatpush1.msra.mxu0 %v154
      %175 = vmatprep.subr.mxu0 0.0
      %176 = vmatpush1.msra.mxu0 %v155
      %177 = vmatprep.subr.mxu0 0.0
      %178 = vmatpush1.msra.mxu0 %v156
      %179 = vmatprep.subr.mxu0 0.0
      %180 = vmatpush1.msra.mxu0 %v157
      %181 = vmatprep.subr.mxu0 0.0
      %182 = vmatpush1.msra.mxu0 %v158
      %183 = vmatprep.subr.mxu0 0.0
      %184 = vmatpush1.msra.mxu0 %v159
      %185 = vmatprep.subr.mxu0 0.0
      %186 = vmatpush1.msra.mxu0 %v160
      %187 = vmatprep.subr.mxu0 0.0
      %188 = vmatpush1.msra.mxu0 %v161
      %189 = vmatprep.subr.mxu0 0.0
      %190 = vmatpush1.msra.mxu0 %v162
      %191 = vmatprep.subr.mxu0 0.0
      %192 = vmatpush1.msra.mxu0 %v163
      %193 = vmatprep.subr.mxu0 0.0
      %194 = vmatpush1.msra.mxu0 %v164
      %195 = vmatprep.subr.mxu0 0.0
      %196 = vmatpush1.msra.mxu0 %v165
      %197 = vmatprep.subr.mxu0 0.0
      %198 = vmatpush1.msra.mxu0 %v166
      %199 = vmatprep.subr.mxu0 0.0
      %200 = vmatpush1.msra.mxu0 0.0
      %201 = vmatprep.subr.mxu0 0.0
      %202 = vmatpush1.msra.mxu0 0.0
      %203 = vmatprep.subr.mxu0 0.0
      %204 = vmatpush1.msra.mxu0 0.0
      %205 = vmatprep.subr.mxu0 0.0
      %206 = vmatpush1.msra.mxu0 0.0
      %207 = vmatprep.subr.mxu0 0.0
      %208 = vmatpush1.msra.mxu0 0.0
      %209 = vmatprep.subr.mxu0 0.0
      %210 = vmatpush1.msra.mxu0 0.0
      %211 = vmatprep.subr.mxu0 0.0
      %212 = vmatpush1.msra.mxu0 0.0
      %213 = vmatprep.subr.mxu0 0.0
      %214 = vmatpush1.msra.mxu0 0.0
      %215 = vmatprep.subr.mxu0 0.0
      %216 = vmatpush1.msra.mxu0 0.0
      %217 = vmatprep.subr.mxu0 0.0
      %218 = vmatpush1.msra.mxu0 0.0
      %219 = vmatprep.subr.mxu0 0.0
      %220 = vmatpush1.msra.mxu0 0.0
      %221 = vmatprep.subr.mxu0 0.0
      %222 = vmatpush1.msra.mxu0 0.0
      %223 = vmatprep.subr.mxu0 0.0
      %224 = vmatpush1.msra.mxu0 0.0
      %225 = vmatprep.subr.mxu0 0.0
      %226 = vmatpush1.msra.mxu0 0.0
      %227 = vmatprep.subr.mxu0 0.0
      %228 = vmatpush1.msra.mxu0 0.0
      %229 = vmatprep.subr.mxu0 0.0
      %230 = vmatpush1.msra.mxu0 0.0
      %231 = vmatprep.mubr.f32.mxu0 0.0
      %232 = vmatmul.mubr.f32.gmra.mrb[0].mxu0 %v149
      %v233 = vpop.f32.mrb[0].mxu0
      %v234 = vadd.f32 0.0, %v233
      %v235 = vpop.f32.mrb[0].mxu0
      %236 = vmatprep.mubr.f32.mxu0 0.0
      %237 = vmatmul.mubr.f32.gmra.mrb[0].mxu0 %v150
      %v238 = vpop.f32.mrb[0].mxu0
      %v239 = vadd.f32 0.0, %v238
      %v240 = vpop.f32.mrb[0].mxu0
      %241 = vdwg.mxu0
      %v242 = vld [vmem:[#allocation2] sm:$0xff]
      %v243 = vld [vmem:[#allocation2 + $0x8] sm:$0xff]
      %v244 = vadd.f32 %v242, %v234
      %v245 = vadd.f32 %v243, %v239
      %246 = vst [vmem:[%s5] sm:$0xff] %v244
      %247 = vst [vmem:[%s5 + $0x8] sm:$0xff] %v245
    $region33: #{to_qkv_wrapped_with_lora.3} parent=1 // pred_fallthru
      _
    // Predicated region
    $region34: #{to_qkv_wrapped_with_lora.3} parent=1 // pred_check
      _
    $region35: #{to_qkv_wrapped_with_lora.3} parent=1 // pred_check_branch
      %249 = sbr.rel (0) target = $region37
    $region36: #{to_qkv_wrapped_with_lora.3} parent=1 // pred_region
      _
    $region37: #{to_qkv_wrapped_with_lora.3} parent=1 // pred_fallthru
      _
    // Predicated region
    $region38: #{to_qkv_wrapped_with_lora.3} parent=1 // pred_check
      _
    $region39: #{to_qkv_wrapped_with_lora.3} parent=1 // pred_check_branch
      %251 = sbr.rel (0) target = $region41
    $region40: #{to_qkv_wrapped_with_lora.3} parent=1 // pred_region
      _
    $region41: #{to_qkv_wrapped_with_lora.3} parent=1 // pred_fallthru
      _
    %252 = vsyncpa [#allocation4], 1

</llo_original>
